<compile_context>
chip_gen: v7x
topology: tpu7x:2x2x1
jax: 0.10.0
libtpu: 0.0.40
codegen_flags: <defaults>
</compile_context>

<pallas_src>
import functools

import jax
import jax.numpy as jnp
from jax.experimental import pallas as pl
from jax.experimental.pallas import tpu as pltpu

LANE = 128


def _round_up(x, m):
    return (x + m - 1) // m * m


# ----------------------------- Pallas kernel -------------------------------- #
def _discriminator_kernel(x_ref,
                          w1_ref, b1_ref,
                          w2_ref, b2_ref,
                          w3_ref, b3_ref,
                          wf_ref, bf_ref,
                          out_ref):
    """One batch tile of the fused 4-layer MLP forward."""
    slope = jnp.float32(0.2)

    def leaky_relu(v):
        return jnp.where(v >= 0, v, v * slope)

    x = x_ref[...]  # (TM, D0p) bf16

    # Hidden layer 1: bf16 matmul, f32 accumulate.
    h = jnp.dot(x, w1_ref[...], preferred_element_type=jnp.float32) + b1_ref[...]
    h = leaky_relu(h)
    # Hidden layer 2
    h = jnp.dot(h.astype(jnp.bfloat16), w2_ref[...],
                preferred_element_type=jnp.float32) + b2_ref[...]
    h = leaky_relu(h)
    # Hidden layer 3
    h = jnp.dot(h.astype(jnp.bfloat16), w3_ref[...],
                preferred_element_type=jnp.float32) + b3_ref[...]
    h = leaky_relu(h)

    # Final layer (out_features == 1): VPU multiply + XLU lane reduction instead
    # of a degenerate N=1 MXU matmul.
    y = jnp.sum(h * wf_ref[...], axis=-1, keepdims=True) + bf_ref[0, 0]   # (TM, 1) f32

    # Lane-dense store: broadcast the column across 128 lanes; wrapper slices col 0.
    out_ref[...] = jnp.broadcast_to(y, out_ref.shape).astype(out_ref.dtype)


# ------------------------------- wrapper ------------------------------------- #
def discriminator_forward(x, params, *, block_m=256):
    """x: (B, input_dim) float32.

    params: packed params from `pack_params` — 3 hidden (W_t bf16 (in_p,out_p),
    b f32 (1,out_p)) plus final (wf_row f32 (1,h3_p), bf f32 (1,1)).
    block_m: batch tile; use multiples of 256 on v6e/v7x, 128 on v5e.
    """
    (w1, b1), (w2, b2), (w3, b3), (wf_row, bf) = params
    batch, in_dim = x.shape
    d0p, h1p = w1.shape
    h2p = w2.shape[1]
    h3p = w3.shape[1]

    # Batch tile: full block_m for large batches, minimal (8-aligned) for tiny ones.
    tm = min(block_m, _round_up(batch, 8))
    b_pad = _round_up(batch, tm)
    grid = (b_pad // tm,)

    # Zero-pad x to (b_pad, d0p) and cast to bf16 (halves x DMA traffic).
    xp = jnp.zeros((b_pad, d0p), jnp.bfloat16)
    xp = xp.at[:batch, :in_dim].set(x.astype(jnp.bfloat16))

    flops = 2 * b_pad * (d0p * h1p + h1p * h2p + h2p * h3p + h3p)
    bytes_accessed = (xp.size * 2
                      + (w1.size + w2.size + w3.size) * 2
                      + (b1.size + b2.size + b3.size + wf_row.size + bf.size) * 4
                      + b_pad * LANE * 4)
    cost = pl.CostEstimate(flops=flops, transcendentals=0,
                           bytes_accessed=bytes_accessed)

    const2 = lambda i: (0, 0)  # weights/biases resident across all grid steps

    out = pl.pallas_call(
        _discriminator_kernel,
        out_shape=jax.ShapeDtypeStruct((b_pad, LANE), jnp.float32),
        grid=grid,
        in_specs=[
            pl.BlockSpec((tm, d0p), lambda i: (i, 0)),        # x tile
            pl.BlockSpec((d0p, h1p), const2),                 # W1
            pl.BlockSpec((1, h1p), const2),                   # b1
            pl.BlockSpec((h1p, h2p), const2),                 # W2
            pl.BlockSpec((1, h2p), const2),                   # b2
            pl.BlockSpec((h2p, h3p), const2),                 # W3
            pl.BlockSpec((1, h3p), const2),                   # b3
            pl.BlockSpec((1, h3p), const2),                   # wf row (f32)
            pl.BlockSpec(memory_space=pltpu.MemorySpace.SMEM),  # bf scalar
        ],
        out_specs=pl.BlockSpec((tm, LANE), lambda i: (i, 0)),
        compiler_params=pltpu.CompilerParams(
            dimension_semantics=("parallel",)),
        cost_estimate=cost,
    )(xp, w1, b1, w2, b2, w3, b3, wf_row, bf)

    return out[:batch, :1]


# ------------------------- parameter setup (glue) --------------------------- #
def _spectral_normalize(w, key, n_power_iterations=1, eps=1e-12):
    """Mimic torch.nn.utils.spectral_norm: w is (out, in); returns w / sigma."""
    out_dim, _ = w.shape
    u = jax.random.normal(key, (out_dim,), dtype=jnp.float32)
    u = u / (jnp.linalg.norm(u) + eps)
    v = None
    for _ in range(n_power_iterations):
        v = w.T @ u
        v = v / (jnp.linalg.norm(v) + eps)
        u = w @ v
        u = u / (jnp.linalg.norm(u) + eps)
    sigma = u @ (w @ v)
    return w / sigma


def init_params(key, input_dim, hidden_dims):
    """PyTorch-style init + spectral norm. Returns raw [(W (out,in), b (out,)), ...]."""
    dims = [input_dim] + list(hidden_dims) + [1]
    raw = []
    for i in range(len(dims) - 1):
        key, wk, bk, sk = jax.random.split(key, 4)
        fan_in, fan_out = dims[i], dims[i + 1]
        bound = 1.0 / (fan_in ** 0.5)   # nn.Linear default: U(-1/sqrt(fan_in), ...)
        w = jax.random.uniform(wk, (fan_out, fan_in), jnp.float32, -bound, bound)
        b = jax.random.uniform(bk, (fan_out,), jnp.float32, -bound, bound)
        w = _spectral_normalize(w, sk)  # spectral_norm=True for every layer
        raw.append((w, b))
    return raw


def pack_params(raw_params):
    """Pad feature dims to multiples of 128, transpose W->(in,out), bf16 hidden weights."""
    assert len(raw_params) == 4, "kernel is specialized for 3 hidden layers + final"
    *hidden, (wf, bf) = raw_params
    packed = []
    for (w, b) in hidden:
        out_dim, in_dim = w.shape
        in_p, out_p = _round_up(in_dim, LANE), _round_up(out_dim, LANE)
        wt = jnp.zeros((in_p, out_p), jnp.float32).at[:in_dim, :out_dim].set(w.T)
        bp = jnp.zeros((1, out_p), jnp.float32).at[0, :out_dim].set(b)
        packed.append((wt.astype(jnp.bfloat16), bp))
    h3 = wf.shape[1]
    h3p = _round_up(h3, LANE)
    wf_row = jnp.zeros((1, h3p), jnp.float32).at[0, :h3].set(wf[0])
    bf_s = jnp.asarray(bf, jnp.float32).reshape(1, 1)
    packed.append((wf_row, bf_s))
    return packed


def _reference_forward(x, raw_params):
    """Pure-JAX f32 reference for correctness checking."""
    h = x
    for (w, b) in raw_params[:-1]:
        h = h @ w.T + b
        h = jnp.where(h >= 0, h, 0.2 * h)
    wf, bf = raw_params[-1]
    return h @ wf.T + bf


# --------------------------------- main -------------------------------------- #
if __name__ == "__main__":
    key = jax.random.PRNGKey(0)
    batch = 8
    input_dim = 32
    hidden_dims = [64, 128, 64]   # small stand-ins for default [256, 512, 256]

    k_params, k_x = jax.random.split(key)
    raw_params = init_params(k_params, input_dim, hidden_dims)
    params = pack_params(raw_params)
    x = jax.random.normal(k_x, (batch, input_dim), dtype=jnp.float32)

    fwd = jax.jit(functools.partial(discriminator_forward, params=params))
    scores = fwd(x)
    jax.block_until_ready(scores)

    assert scores.shape == (batch, 1)
    assert bool(jnp.all(jnp.isfinite(scores)))

    ref = _reference_forward(x, raw_params)
    err = float(jnp.max(jnp.abs(scores - ref)))
    assert err < 5e-2, f"mismatch vs f32 reference: max abs err {err}"

    print("KERNEL_OK")
</pallas_src>

<mosaic_0001>
module attributes {stable_mosaic.version = 11 : i64} {
  func.func @_discriminator_kernel(%arg0: i32, %arg1: memref<8x128xbf16, #tpu.memory_space<vmem>>, %arg2: memref<128x128xbf16, #tpu.memory_space<vmem>>, %arg3: memref<1x128xf32, #tpu.memory_space<vmem>>, %arg4: memref<128x128xbf16, #tpu.memory_space<vmem>>, %arg5: memref<1x128xf32, #tpu.memory_space<vmem>>, %arg6: memref<128x128xbf16, #tpu.memory_space<vmem>>, %arg7: memref<1x128xf32, #tpu.memory_space<vmem>>, %arg8: memref<1x128xf32, #tpu.memory_space<vmem>>, %arg9: memref<1x1xf32, #tpu.memory_space<smem>>, %arg10: memref<8x128xf32, #tpu.memory_space<vmem>>) attributes {dimension_semantics = [#tpu.dimension_semantics<parallel>], iteration_bounds = array<i64: 1>, scalar_prefetch = 0 : i64, scratch_operands = 0 : i64, tpu.core_type = #tpu.core_type<tc>, window_params = [{transform_indices = @transform_0, window_bounds = array<i64: 8, 128>}, {pipeline_mode = #tpu.pipeline_mode<synchronous>, transform_indices = @transform_1, window_bounds = array<i64: 128, 128>}, {pipeline_mode = #tpu.pipeline_mode<synchronous>, transform_indices = @transform_2, window_bounds = array<i64: 1, 128>}, {pipeline_mode = #tpu.pipeline_mode<synchronous>, transform_indices = @transform_3, window_bounds = array<i64: 128, 128>}, {pipeline_mode = #tpu.pipeline_mode<synchronous>, transform_indices = @transform_4, window_bounds = array<i64: 1, 128>}, {pipeline_mode = #tpu.pipeline_mode<synchronous>, transform_indices = @transform_5, window_bounds = array<i64: 128, 128>}, {pipeline_mode = #tpu.pipeline_mode<synchronous>, transform_indices = @transform_6, window_bounds = array<i64: 1, 128>}, {pipeline_mode = #tpu.pipeline_mode<synchronous>, transform_indices = @transform_7, window_bounds = array<i64: 1, 128>}, {transform_indices = @transform_8, window_bounds = array<i64: 1, 1>}, {transform_indices = @transform_9, window_bounds = array<i64: 8, 128>}]} {
    %c0 = arith.constant 0 : index
    %c0_0 = arith.constant 0 : index
    %0 = vector.load %arg1[%c0, %c0_0] : memref<8x128xbf16, #tpu.memory_space<vmem>>, vector<8x128xbf16>
    %c0_1 = arith.constant 0 : index
    %c0_2 = arith.constant 0 : index
    %1 = vector.load %arg2[%c0_1, %c0_2] : memref<128x128xbf16, #tpu.memory_space<vmem>>, vector<128x128xbf16>
    %cst = arith.constant dense<0.000000e+00> : vector<8x128xf32>
    %2 = tpu.matmul %0, %1, %cst {dimension_numbers = #tpu.dot_dimension_numbers<[1], [0], [0], [1], [0, 0, 1, 1], [], []>} : vector<8x128xbf16>, vector<128x128xbf16>, vector<8x128xf32> -> vector<8x128xf32>
    %c0_3 = arith.constant 0 : index
    %c0_4 = arith.constant 0 : index
    %3 = vector.load %arg3[%c0_3, %c0_4] : memref<1x128xf32, #tpu.memory_space<vmem>>, vector<1x128xf32>
    %4 = vector.broadcast %3 : vector<1x128xf32> to vector<8x128xf32>
    %5 = arith.addf %2, %4 : vector<8x128xf32>
    %cst_5 = arith.constant 0.000000e+00 : f32
    %6 = vector.broadcast %cst_5 : f32 to vector<8x128xf32>
    %7 = arith.cmpf oge, %5, %6 : vector<8x128xf32>
    %cst_6 = arith.constant 2.000000e-01 : f32
    %8 = vector.broadcast %cst_6 : f32 to vector<8x128xf32>
    %9 = arith.mulf %5, %8 : vector<8x128xf32>
    %10 = arith.select %7, %5, %9 : vector<8x128xi1>, vector<8x128xf32>
    %11 = arith.truncf %10 : vector<8x128xf32> to vector<8x128xbf16>
    %c0_7 = arith.constant 0 : index
    %c0_8 = arith.constant 0 : index
    %12 = vector.load %arg4[%c0_7, %c0_8] : memref<128x128xbf16, #tpu.memory_space<vmem>>, vector<128x128xbf16>
    %cst_9 = arith.constant dense<0.000000e+00> : vector<8x128xf32>
    %13 = tpu.matmul %11, %12, %cst_9 {dimension_numbers = #tpu.dot_dimension_numbers<[1], [0], [0], [1], [0, 0, 1, 1], [], []>} : vector<8x128xbf16>, vector<128x128xbf16>, vector<8x128xf32> -> vector<8x128xf32>
    %c0_10 = arith.constant 0 : index
    %c0_11 = arith.constant 0 : index
    %14 = vector.load %arg5[%c0_10, %c0_11] : memref<1x128xf32, #tpu.memory_space<vmem>>, vector<1x128xf32>
    %15 = vector.broadcast %14 : vector<1x128xf32> to vector<8x128xf32>
    %16 = arith.addf %13, %15 : vector<8x128xf32>
    %cst_12 = arith.constant 0.000000e+00 : f32
    %17 = vector.broadcast %cst_12 : f32 to vector<8x128xf32>
    %18 = arith.cmpf oge, %16, %17 : vector<8x128xf32>
    %cst_13 = arith.constant 2.000000e-01 : f32
    %19 = vector.broadcast %cst_13 : f32 to vector<8x128xf32>
    %20 = arith.mulf %16, %19 : vector<8x128xf32>
    %21 = arith.select %18, %16, %20 : vector<8x128xi1>, vector<8x128xf32>
    %22 = arith.truncf %21 : vector<8x128xf32> to vector<8x128xbf16>
    %c0_14 = arith.constant 0 : index
    %c0_15 = arith.constant 0 : index
    %23 = vector.load %arg6[%c0_14, %c0_15] : memref<128x128xbf16, #tpu.memory_space<vmem>>, vector<128x128xbf16>
    %cst_16 = arith.constant dense<0.000000e+00> : vector<8x128xf32>
    %24 = tpu.matmul %22, %23, %cst_16 {dimension_numbers = #tpu.dot_dimension_numbers<[1], [0], [0], [1], [0, 0, 1, 1], [], []>} : vector<8x128xbf16>, vector<128x128xbf16>, vector<8x128xf32> -> vector<8x128xf32>
    %c0_17 = arith.constant 0 : index
    %c0_18 = arith.constant 0 : index
    %25 = vector.load %arg7[%c0_17, %c0_18] : memref<1x128xf32, #tpu.memory_space<vmem>>, vector<1x128xf32>
    %26 = vector.broadcast %25 : vector<1x128xf32> to vector<8x128xf32>
    %27 = arith.addf %24, %26 : vector<8x128xf32>
    %cst_19 = arith.constant 0.000000e+00 : f32
    %28 = vector.broadcast %cst_19 : f32 to vector<8x128xf32>
    %29 = arith.cmpf oge, %27, %28 : vector<8x128xf32>
    %cst_20 = arith.constant 2.000000e-01 : f32
    %30 = vector.broadcast %cst_20 : f32 to vector<8x128xf32>
    %31 = arith.mulf %27, %30 : vector<8x128xf32>
    %32 = arith.select %29, %27, %31 : vector<8x128xi1>, vector<8x128xf32>
    %c0_21 = arith.constant 0 : index
    %c0_22 = arith.constant 0 : index
    %33 = vector.load %arg8[%c0_21, %c0_22] : memref<1x128xf32, #tpu.memory_space<vmem>>, vector<1x128xf32>
    %34 = vector.broadcast %33 : vector<1x128xf32> to vector<8x128xf32>
    %35 = arith.mulf %32, %34 : vector<8x128xf32>
    %cst_23 = arith.constant dense<0.000000e+00> : vector<8xf32>
    %36 = vector.multi_reduction <add>, %35, %cst_23 [1] : vector<8x128xf32> to vector<8xf32>
    %37 = vector.shape_cast %36 : vector<8xf32> to vector<8x1xf32>
    %c0_24 = arith.constant 0 : index
    %c0_25 = arith.constant 0 : index
    %38 = memref.load %arg9[%c0_24, %c0_25] : memref<1x1xf32, #tpu.memory_space<smem>>
    %39 = vector.broadcast %38 : f32 to vector<8x1xf32>
    %40 = arith.addf %37, %39 : vector<8x1xf32>
    %41 = vector.shape_cast %40 : vector<8x1xf32> to vector<8x1xf32>
    %42 = vector.broadcast %41 : vector<8x1xf32> to vector<8x128xf32>
    %c0_26 = arith.constant 0 : index
    %c0_27 = arith.constant 0 : index
    %43 = vector.load %arg10[%c0_26, %c0_27] : memref<8x128xf32, #tpu.memory_space<vmem>>, vector<8x128xf32>
    tpu.vector_store %arg10[%c0_26, %c0_27], %42 {strides = array<i32>} : memref<8x128xf32, #tpu.memory_space<vmem>>, vector<8x128xf32>,
    return
  }
  func.func @transform_0(%arg0: i32) -> (i32, i32) {
    %c0_i32 = arith.constant 0 : i32
    %c0_i32_0 = arith.constant 0 : i32
    return %arg0, %c0_i32 : i32, i32
  }
  func.func @transform_1(%arg0: i32) -> (i32, i32) {
    %c0_i32 = arith.constant 0 : i32
    %c0_i32_0 = arith.constant 0 : i32
    %c0_i32_1 = arith.constant 0 : i32
    return %c0_i32, %c0_i32_0 : i32, i32
  }
  func.func @transform_2(%arg0: i32) -> (i32, i32) {
    %c0_i32 = arith.constant 0 : i32
    %c0_i32_0 = arith.constant 0 : i32
    %c0_i32_1 = arith.constant 0 : i32
    return %c0_i32, %c0_i32_0 : i32, i32
  }
  func.func @transform_3(%arg0: i32) -> (i32, i32) {
    %c0_i32 = arith.constant 0 : i32
    %c0_i32_0 = arith.constant 0 : i32
    %c0_i32_1 = arith.constant 0 : i32
    return %c0_i32, %c0_i32_0 : i32, i32
  }
  func.func @transform_4(%arg0: i32) -> (i32, i32) {
    %c0_i32 = arith.constant 0 : i32
    %c0_i32_0 = arith.constant 0 : i32
    %c0_i32_1 = arith.constant 0 : i32
    return %c0_i32, %c0_i32_0 : i32, i32
  }
  func.func @transform_5(%arg0: i32) -> (i32, i32) {
    %c0_i32 = arith.constant 0 : i32
    %c0_i32_0 = arith.constant 0 : i32
    %c0_i32_1 = arith.constant 0 : i32
    return %c0_i32, %c0_i32_0 : i32, i32
  }
  func.func @transform_6(%arg0: i32) -> (i32, i32) {
    %c0_i32 = arith.constant 0 : i32
    %c0_i32_0 = arith.constant 0 : i32
    %c0_i32_1 = arith.constant 0 : i32
    return %c0_i32, %c0_i32_0 : i32, i32
  }
  func.func @transform_7(%arg0: i32) -> (i32, i32) {
    %c0_i32 = arith.constant 0 : i32
    %c0_i32_0 = arith.constant 0 : i32
    %c0_i32_1 = arith.constant 0 : i32
    return %c0_i32, %c0_i32_0 : i32, i32
  }
  func.func @transform_8(%arg0: i32) -> (i32, i32) {
    %c0_i32 = arith.constant 0 : i32
    %c0_i32_0 = arith.constant 0 : i32
    %c0_i32_1 = arith.constant 0 : i32
    return %c0_i32, %c0_i32_0 : i32, i32
  }
  func.func @transform_9(%arg0: i32) -> (i32, i32) {
    %c0_i32 = arith.constant 0 : i32
    %c0_i32_0 = arith.constant 0 : i32
    return %arg0, %c0_i32 : i32, i32
  }
}

</mosaic_0001>

<llo_original>
// kernel: discriminator_forward.1
$region0: #{discriminator_forward.1}
  #allocation0 [shape = 'u32[]', space=smem, size = 0x4, offset = 0x4, fixed_abs, tag = 'smem constant byte address 0x4 - core index']
  #allocation1 [shape = 'u32[144,128]{1,0:T(1,128)}', space=vmem, size = 0x12000, scoped, tag = 'internal scratch']
  #allocation2 [shape = 'f32[1,1]{1,0:T(1,128)S(6)}', space=smem, size = 0x200, scoped, tag = 'scoped memory for discriminator_forward.1']
  %s0 = inlined_call_operand.vmem [shape: bf16[8,128], index: 0, kind: input, shape index: {}]
  %s1 = inlined_call_operand.hbm [shape: bf16[128,128], index: 1, kind: input, shape index: {}]
  %s2 = inlined_call_operand.vmem [shape: f32[1,128], index: 2, kind: input, shape index: {}]
  %s3 = inlined_call_operand.hbm [shape: bf16[128,128], index: 3, kind: input, shape index: {}]
  %s4 = inlined_call_operand.vmem [shape: f32[1,128], index: 4, kind: input, shape index: {}]
  %s5 = inlined_call_operand.vmem [shape: bf16[128,128], index: 5, kind: input, shape index: {}]
  %s6 = inlined_call_operand.vmem [shape: f32[1,128], index: 6, kind: input, shape index: {}]
  %s7 = inlined_call_operand.vmem [shape: f32[1,128], index: 7, kind: input, shape index: {}]
  %s8 = inlined_call_operand.<no memory space> [shape: f32[1,1], index: 8, kind: input, shape index: {}]
  %s9 = inlined_call_operand.vmem [shape: f32[8,128], index: 9, kind: output, shape index: {}]
  %s10 = sld [smem:[#allocation0]]
  $region54: #{discriminator_forward.1} parent=0
    _
  %s12 = ssub.s32 1, %s10
  %s13 = scalar_select 0, %s12, %s10
  %14 = sst [smem:[#allocation2]] %s8
  $region1: #{discriminator_forward.1} parent=0
    #allocation3 [shape = 'u8[32768]{0}', space=vmem, size = 0x8000, scoped, tag = 'input window, operand 1, single buffered']
    #allocation4 [shape = 's32[1]{0}', space=sflag, size = 0x4, scoped, tag = 'scoped memory for discriminator_forward.1']
    #allocation5 [shape = 'u8[32768]{0}', space=vmem, size = 0x8000, scoped, tag = 'input window, operand 3, single buffered']
    #allocation6 [shape = 's32[1]{0}', space=sflag, size = 0x4, scoped, tag = 'scoped memory for discriminator_forward.1']
    %15 = vsyncpa [#allocation4], 0
    %16 = vsyncpa [#allocation6], 0
    // Predicated region
    $region2: #{discriminator_forward.1} parent=1 // pred_check
      _
    $region3: #{discriminator_forward.1} parent=1 // pred_check_branch
      %18 = sbr.rel (0) target = $region5
    $region4: #{discriminator_forward.1} parent=1 // pred_region
      _
    $region5: #{discriminator_forward.1} parent=1 // pred_fallthru
      _
    // Predicated region
    $region6: #{discriminator_forward.1} parent=1 // pred_check
      _
    $region7: #{discriminator_forward.1} parent=1 // pred_check_branch
      %20 = sbr.rel (0) target = $region9
    $region8: #{discriminator_forward.1} parent=1 // pred_region
      %s22 = ssub.s32 1024, 1024
      %23 = vsyncadd [#allocation4], %s22
      %s24 = sshll.u32 [#allocation3], 4
      %s25 = int_to_ptr.vmem [resolvable:$true] %s24
      %30 = dma.hbm_to_vmem [thread:$0]  %s1, 1024, %s25, [#allocation4], 64, 64, 4
    $region9: #{discriminator_forward.1} parent=1 // pred_fallthru
      _
    // Predicated region
    $region10: #{discriminator_forward.1} parent=1 // pred_check
      _
    $region11: #{discriminator_forward.1} parent=1 // pred_check_branch
      %32 = sbr.rel (0) target = $region13
    $region12: #{discriminator_forward.1} parent=1 // pred_region
      _
    $region13: #{discriminator_forward.1} parent=1 // pred_fallthru
      _
    // Predicated region
    $region14: #{discriminator_forward.1} parent=1 // pred_check
      _
    $region15: #{discriminator_forward.1} parent=1 // pred_check_branch
      %34 = sbr.rel (0) target = $region17
    $region16: #{discriminator_forward.1} parent=1 // pred_region
      %s36 = ssub.s32 1024, 1024
      %37 = vsyncadd [#allocation6], %s36
      %s38 = sshll.u32 [#allocation5], 4
      %s39 = int_to_ptr.vmem [resolvable:$true] %s38
      %44 = dma.hbm_to_vmem [thread:$0]  %s3, 1024, %s39, [#allocation6], 64, 64, 4
    $region17: #{discriminator_forward.1} parent=1 // pred_fallthru
      _
    // Predicated region
    $region18: #{discriminator_forward.1} parent=1 // pred_check
      _
    $region19: #{discriminator_forward.1} parent=1 // pred_check_branch
      %46 = sbr.rel (0) target = $region21
    $region20: #{discriminator_forward.1} parent=1 // pred_region
      _
    $region21: #{discriminator_forward.1} parent=1 // pred_fallthru
      _
    // Predicated region
    $region22: #{discriminator_forward.1} parent=1 // pred_check
      _
    $region23: #{discriminator_forward.1} parent=1 // pred_check_branch
      %48 = sbr.rel (0) target = $region25
    $region24: #{discriminator_forward.1} parent=1 // pred_region
      _
    $region25: #{discriminator_forward.1} parent=1 // pred_fallthru
      _
    // Predicated region
    $region26: #{discriminator_forward.1} parent=1 // pred_check
      _
    $region27: #{discriminator_forward.1} parent=1 // pred_check_branch
      %50 = sbr.rel (0) target = $region29
    $region28: #{discriminator_forward.1} parent=1 // pred_region
      _
    $region29: #{discriminator_forward.1} parent=1 // pred_fallthru
      _
    // Predicated region
    $region30: #{discriminator_forward.1} parent=1 // pred_check
      _
    $region31: #{discriminator_forward.1} parent=1 // pred_check_branch
      %52 = sbr.rel (0) target = $region33
    $region32: #{discriminator_forward.1} parent=1 // pred_region
      _
    $region33: #{discriminator_forward.1} parent=1 // pred_fallthru
      _
    // Predicated region
    $region34: #{discriminator_forward.1} parent=1 // pred_check
      _
    $region35: #{discriminator_forward.1} parent=1 // pred_check_branch
      %54 = sbr.rel (0) target = $region37
    $region36: #{discriminator_forward.1} parent=1 // pred_region
      _
    $region37: #{discriminator_forward.1} parent=1 // pred_fallthru
      _
    // Predicated region
    $region38: #{discriminator_forward.1} parent=1 // pred_check
      _
    $region39: #{discriminator_forward.1} parent=1 // pred_check_branch
      %56 = sbr.rel (0) target = $region41
    $region40: #{discriminator_forward.1} parent=1 // pred_region
      %57 = dma.done [#allocation4], 1024
    $region41: #{discriminator_forward.1} parent=1 // pred_fallthru
      _
    // Predicated region
    $region42: #{discriminator_forward.1} parent=1 // pred_check
      _
    $region43: #{discriminator_forward.1} parent=1 // pred_check_branch
      %59 = sbr.rel (0) target = $region45
    $region44: #{discriminator_forward.1} parent=1 // pred_region
      %60 = dma.done [#allocation6], 1024
    $region45: #{discriminator_forward.1} parent=1 // pred_fallthru
      _
    %v62 = vld [vmem:[%s0] sm:$0xf]
    %v63 = vld [vmem:[#allocation3] sm:$0xf]
    %v64 = vld [vmem:[#allocation3 + $0x4] sm:$0xf]
    %v65 = vld [vmem:[#allocation3 + $0x8] sm:$0xf]
    %v66 = vld [vmem:[#allocation3 + $0xc] sm:$0xf]
    %v67 = vld [vmem:[#allocation3 + $0x10] sm:$0xf]
    %v68 = vld [vmem:[#allocation3 + $0x14] sm:$0xf]
    %v69 = vld [vmem:[#allocation3 + $0x18] sm:$0xf]
    %v70 = vld [vmem:[#allocation3 + $0x1c] sm:$0xf]
    %v71 = vld [vmem:[#allocation3 + $0x20] sm:$0xf]
    %v72 = vld [vmem:[#allocation3 + $0x24] sm:$0xf]
    %v73 = vld [vmem:[#allocation3 + $0x28] sm:$0xf]
    %v74 = vld [vmem:[#allocation3 + $0x2c] sm:$0xf]
    %v75 = vld [vmem:[#allocation3 + $0x30] sm:$0xf]
    %v76 = vld [vmem:[#allocation3 + $0x34] sm:$0xf]
    %v77 = vld [vmem:[#allocation3 + $0x38] sm:$0xf]
    %v78 = vld [vmem:[#allocation3 + $0x3c] sm:$0xf]
    %v79 = vld [vmem:[%s2] sm:$0x1]
    %v81 = vlaneseq
    %v82 = vshrl.u32 %v81, 7
    %v83 = vsub.s32 0, %v82
    %v84 = vrot.slane %v79, %v83
    %v102 = vunpack.c.l.b16 %v63
    %v103 = vunpack.c.l.b16 %v64
    %v104 = vunpack.c.l.b16 %v65
    %v105 = vunpack.c.l.b16 %v66
    %v106 = vunpack.c.l.b16 %v67
    %v107 = vunpack.c.l.b16 %v68
    %v108 = vunpack.c.l.b16 %v69
    %v109 = vunpack.c.l.b16 %v70
    %v110 = vunpack.c.l.b16 %v71
    %v111 = vunpack.c.l.b16 %v72
    %v112 = vunpack.c.l.b16 %v73
    %v113 = vunpack.c.l.b16 %v74
    %v114 = vunpack.c.l.b16 %v75
    %v115 = vunpack.c.l.b16 %v76
    %v116 = vunpack.c.l.b16 %v77
    %v117 = vunpack.c.l.b16 %v78
    %v118 = vpack.c.b16 %v103, %v102
    %v119 = vpack.c.b16 %v105, %v104
    %v120 = vpack.c.b16 %v107, %v106
    %v121 = vpack.c.b16 %v109, %v108
    %v122 = vpack.c.b16 %v111, %v110
    %v123 = vpack.c.b16 %v113, %v112
    %v124 = vpack.c.b16 %v115, %v114
    %v125 = vpack.c.b16 %v117, %v116
    %134 = vmatprep.subr.bf16.mxu0 0
    %135 = vmatpush1.bf16.msra.mxu0 %v118
    %136 = vmatprep.subr.bf16.mxu0 0
    %137 = vmatpush1.bf16.msra.mxu0 %v119
    %138 = vmatprep.subr.bf16.mxu0 0
    %139 = vmatpush1.bf16.msra.mxu0 %v120
    %140 = vmatprep.subr.bf16.mxu0 0
    %141 = vmatpush1.bf16.msra.mxu0 %v121
    %142 = vmatprep.subr.bf16.mxu0 0
    %143 = vmatpush1.bf16.msra.mxu0 %v122
    %144 = vmatprep.subr.bf16.mxu0 0
    %145 = vmatpush1.bf16.msra.mxu0 %v123
    %146 = vmatprep.subr.bf16.mxu0 0
    %147 = vmatpush1.bf16.msra.mxu0 %v124
    %148 = vmatprep.subr.bf16.mxu0 0
    %149 = vmatpush1.bf16.msra.mxu0 %v125
    %150 = vmatprep.subr.bf16.mxu0 0
    %151 = vmatpush1.bf16.msra.mxu0 0
    %152 = vmatprep.subr.bf16.mxu0 0
    %153 = vmatpush1.bf16.msra.mxu0 0
    %154 = vmatprep.subr.bf16.mxu0 0
    %155 = vmatpush1.bf16.msra.mxu0 0
    %156 = vmatprep.subr.bf16.mxu0 0
    %157 = vmatpush1.bf16.msra.mxu0 0
    %158 = vmatprep.subr.bf16.mxu0 0
    %159 = vmatpush1.bf16.msra.mxu0 0
    %160 = vmatprep.subr.bf16.mxu0 0
    %161 = vmatpush1.bf16.msra.mxu0 0
    %162 = vmatprep.subr.bf16.mxu0 0
    %163 = vmatpush1.bf16.msra.mxu0 0
    %164 = vmatprep.subr.bf16.mxu0 0
    %165 = vmatpush1.bf16.msra.mxu0 0
    %166 = vmatprep.mubr.bf16.mxu0 0
    %167 = vmatmul.mubr.bf16.gmra.mrb[0].mxu0 %v62
    %v168 = vpop.f32.mrb[0].mxu0
    %v169 = vadd.f32 %v84, %v168
    %v170 = vpop.f32.mrb[0].mxu0
    %v171 = vpop.f32.mrb[0].mxu0
    %v172 = vpop.f32.mrb[0].mxu0
    %173 = vdwg.mxu0
    %vm174 = vcmp.ge.f32.partialorder %v169, 0.0
    %v175 = vmul.f32 %v169, 0.2
    %v176 = vsel %vm174, %v169, %v175
    %v177 = vpack.c.bf16 %v176, %v176
    %v178 = vld [vmem:[#allocation5] sm:$0xf]
    %v179 = vld [vmem:[#allocation5 + $0x4] sm:$0xf]
    %v180 = vld [vmem:[#allocation5 + $0x8] sm:$0xf]
    %v181 = vld [vmem:[#allocation5 + $0xc] sm:$0xf]
    %v182 = vld [vmem:[#allocation5 + $0x10] sm:$0xf]
    %v183 = vld [vmem:[#allocation5 + $0x14] sm:$0xf]
    %v184 = vld [vmem:[#allocation5 + $0x18] sm:$0xf]
    %v185 = vld [vmem:[#allocation5 + $0x1c] sm:$0xf]
    %v186 = vld [vmem:[#allocation5 + $0x20] sm:$0xf]
    %v187 = vld [vmem:[#allocation5 + $0x24] sm:$0xf]
    %v188 = vld [vmem:[#allocation5 + $0x28] sm:$0xf]
    %v189 = vld [vmem:[#allocation5 + $0x2c] sm:$0xf]
    %v190 = vld [vmem:[#allocation5 + $0x30] sm:$0xf]
    %v191 = vld [vmem:[#allocation5 + $0x34] sm:$0xf]
    %v192 = vld [vmem:[#allocation5 + $0x38] sm:$0xf]
    %v193 = vld [vmem:[#allocation5 + $0x3c] sm:$0xf]
    %v194 = vld [vmem:[%s4] sm:$0x1]
    %v196 = vlaneseq
    %v197 = vshrl.u32 %v196, 7
    %v198 = vsub.s32 0, %v197
    %v199 = vrot.slane %v194, %v198
    %v217 = vunpack.c.l.b16 %v178
    %v218 = vunpack.c.l.b16 %v179
    %v219 = vunpack.c.l.b16 %v180
    %v220 = vunpack.c.l.b16 %v181
    %v221 = vunpack.c.l.b16 %v182
    %v222 = vunpack.c.l.b16 %v183
    %v223 = vunpack.c.l.b16 %v184
    %v224 = vunpack.c.l.b16 %v185
    %v225 = vunpack.c.l.b16 %v186
    %v226 = vunpack.c.l.b16 %v187
    %v227 = vunpack.c.l.b16 %v188
    %v228 = vunpack.c.l.b16 %v189
    %v229 = vunpack.c.l.b16 %v190
    %v230 = vunpack.c.l.b16 %v191
    %v231 = vunpack.c.l.b16 %v192
    %v232 = vunpack.c.l.b16 %v193
    %v233 = vpack.c.b16 %v218, %v217
    %v234 = vpack.c.b16 %v220, %v219
    %v235 = vpack.c.b16 %v222, %v221
    %v236 = vpack.c.b16 %v224, %v223
    %v237 = vpack.c.b16 %v226, %v225
    %v238 = vpack.c.b16 %v228, %v227
    %v239 = vpack.c.b16 %v230, %v229
    %v240 = vpack.c.b16 %v232, %v231
    %249 = vmatprep.subr.bf16.mxu0 0
    %250 = vmatpush1.bf16.msra.mxu0 %v233
    %251 = vmatprep.subr.bf16.mxu0 0
    %252 = vmatpush1.bf16.msra.mxu0 %v234
    %253 = vmatprep.subr.bf16.mxu0 0
    %254 = vmatpush1.bf16.msra.mxu0 %v235
    %255 = vmatprep.subr.bf16.mxu0 0
    %256 = vmatpush1.bf16.msra.mxu0 %v236
    %257 = vmatprep.subr.bf16.mxu0 0
    %258 = vmatpush1.bf16.msra.mxu0 %v237
    %259 = vmatprep.subr.bf16.mxu0 0
    %260 = vmatpush1.bf16.msra.mxu0 %v238
    %261 = vmatprep.subr.bf16.mxu0 0
    %262 = vmatpush1.bf16.msra.mxu0 %v239
    %263 = vmatprep.subr.bf16.mxu0 0
    %264 = vmatpush1.bf16.msra.mxu0 %v240
    %265 = vmatprep.subr.bf16.mxu0 0
    %266 = vmatpush1.bf16.msra.mxu0 0
    %267 = vmatprep.subr.bf16.mxu0 0
    %268 = vmatpush1.bf16.msra.mxu0 0
    %269 = vmatprep.subr.bf16.mxu0 0
    %270 = vmatpush1.bf16.msra.mxu0 0
    %271 = vmatprep.subr.bf16.mxu0 0
    %272 = vmatpush1.bf16.msra.mxu0 0
    %273 = vmatprep.subr.bf16.mxu0 0
    %274 = vmatpush1.bf16.msra.mxu0 0
    %275 = vmatprep.subr.bf16.mxu0 0
    %276 = vmatpush1.bf16.msra.mxu0 0
    %277 = vmatprep.subr.bf16.mxu0 0
    %278 = vmatpush1.bf16.msra.mxu0 0
    %279 = vmatprep.subr.bf16.mxu0 0
    %280 = vmatpush1.bf16.msra.mxu0 0
    %281 = vmatprep.mubr.bf16.mxu0 0
    %282 = vmatmul.mubr.bf16.gmra.mrb[0].mxu0 %v177
    %v283 = vpop.f32.mrb[0].mxu0
    %v284 = vadd.f32 %v199, %v283
    %v285 = vpop.f32.mrb[0].mxu0
    %v286 = vpop.f32.mrb[0].mxu0
    %v287 = vpop.f32.mrb[0].mxu0
    %288 = vdwg.mxu0
    %vm289 = vcmp.ge.f32.partialorder %v284, 0.0
    %v290 = vmul.f32 %v284, 0.2
    %v291 = vsel %vm289, %v284, %v290
    %v292 = vpack.c.bf16 %v291, %v291
    %v293 = vld [vmem:[%s5] sm:$0xf]
    %v294 = vld [vmem:[%s5 + $0x4] sm:$0xf]
    %v295 = vld [vmem:[%s5 + $0x8] sm:$0xf]
    %v296 = vld [vmem:[%s5 + $0xc] sm:$0xf]
    %v297 = vld [vmem:[%s5 + $0x10] sm:$0xf]
    %v298 = vld [vmem:[%s5 + $0x14] sm:$0xf]
    %v299 = vld [vmem:[%s5 + $0x18] sm:$0xf]
    %v300 = vld [vmem:[%s5 + $0x1c] sm:$0xf]
    %v301 = vld [vmem:[%s5 + $0x20] sm:$0xf]
    %v302 = vld [vmem:[%s5 + $0x24] sm:$0xf]
    %v303 = vld [vmem:[%s5 + $0x28] sm:$0xf]
    %v304 = vld [vmem:[%s5 + $0x2c] sm:$0xf]
    %v305 = vld [vmem:[%s5 + $0x30] sm:$0xf]
    %v306 = vld [vmem:[%s5 + $0x34] sm:$0xf]
    %v307 = vld [vmem:[%s5 + $0x38] sm:$0xf]
    %v308 = vld [vmem:[%s5 + $0x3c] sm:$0xf]
    %v309 = vld [vmem:[%s6] sm:$0x1]
    %v311 = vlaneseq
    %v312 = vshrl.u32 %v311, 7
    %v313 = vsub.s32 0, %v312
    %v314 = vrot.slane %v309, %v313
    %v332 = vunpack.c.l.b16 %v293
    %v333 = vunpack.c.l.b16 %v294
    %v334 = vunpack.c.l.b16 %v295
    %v335 = vunpack.c.l.b16 %v296
    %v336 = vunpack.c.l.b16 %v297
    %v337 = vunpack.c.l.b16 %v298
    %v338 = vunpack.c.l.b16 %v299
    %v339 = vunpack.c.l.b16 %v300
    %v340 = vunpack.c.l.b16 %v301
    %v341 = vunpack.c.l.b16 %v302
    %v342 = vunpack.c.l.b16 %v303
    %v343 = vunpack.c.l.b16 %v304
    %v344 = vunpack.c.l.b16 %v305
    %v345 = vunpack.c.l.b16 %v306
    %v346 = vunpack.c.l.b16 %v307
    %v347 = vunpack.c.l.b16 %v308
    %v348 = vpack.c.b16 %v333, %v332
    %v349 = vpack.c.b16 %v335, %v334
    %v350 = vpack.c.b16 %v337, %v336
    %v351 = vpack.c.b16 %v339, %v338
    %v352 = vpack.c.b16 %v341, %v340
    %v353 = vpack.c.b16 %v343, %v342
    %v354 = vpack.c.b16 %v345, %v344
    %v355 = vpack.c.b16 %v347, %v346
    %364 = vmatprep.subr.bf16.mxu0 0
    %365 = vmatpush1.bf16.msra.mxu0 %v348
    %366 = vmatprep.subr.bf16.mxu0 0
    %367 = vmatpush1.bf16.msra.mxu0 %v349
    %368 = vmatprep.subr.bf16.mxu0 0
    %369 = vmatpush1.bf16.msra.mxu0 %v350
    %370 = vmatprep.subr.bf16.mxu0 0
    %371 = vmatpush1.bf16.msra.mxu0 %v351
    %372 = vmatprep.subr.bf16.mxu0 0
    %373 = vmatpush1.bf16.msra.mxu0 %v352
    %374 = vmatprep.subr.bf16.mxu0 0
    %375 = vmatpush1.bf16.msra.mxu0 %v353
    %376 = vmatprep.subr.bf16.mxu0 0
    %377 = vmatpush1.bf16.msra.mxu0 %v354
    %378 = vmatprep.subr.bf16.mxu0 0
    %379 = vmatpush1.bf16.msra.mxu0 %v355
    %380 = vmatprep.subr.bf16.mxu0 0
    %381 = vmatpush1.bf16.msra.mxu0 0
    %382 = vmatprep.subr.bf16.mxu0 0
    %383 = vmatpush1.bf16.msra.mxu0 0
    %384 = vmatprep.subr.bf16.mxu0 0
    %385 = vmatpush1.bf16.msra.mxu0 0
    %386 = vmatprep.subr.bf16.mxu0 0
    %387 = vmatpush1.bf16.msra.mxu0 0
    %388 = vmatprep.subr.bf16.mxu0 0
    %389 = vmatpush1.bf16.msra.mxu0 0
    %390 = vmatprep.subr.bf16.mxu0 0
    %391 = vmatpush1.bf16.msra.mxu0 0
    %392 = vmatprep.subr.bf16.mxu0 0
    %393 = vmatpush1.bf16.msra.mxu0 0
    %394 = vmatprep.subr.bf16.mxu0 0
    %395 = vmatpush1.bf16.msra.mxu0 0
    %396 = vmatprep.mubr.bf16.mxu0 0
    %397 = vmatmul.mubr.bf16.gmra.mrb[0].mxu0 %v292
    %v398 = vpop.f32.mrb[0].mxu0
    %v399 = vadd.f32 %v314, %v398
    %v400 = vpop.f32.mrb[0].mxu0
    %v401 = vpop.f32.mrb[0].mxu0
    %v402 = vpop.f32.mrb[0].mxu0
    %403 = vdwg.mxu0
    %vm404 = vcmp.ge.f32.partialorder %v399, 0.0
    %v405 = vmul.f32 %v399, 0.2
    %v406 = vsel %vm404, %v399, %v405
    %v407 = vld [vmem:[%s7] sm:$0x1]
    %v409 = vlaneseq
    %v410 = vshrl.u32 %v409, 7
    %v411 = vsub.s32 0, %v410
    %v412 = vrot.slane %v407, %v411
    %v414 = vmul.f32 %v406, %v412
    %415 = vadd.xlane.f32.xlu0 %v414
    %v416 = vpop.xlane.xlu0 %415
    %s417 = sld [smem:[#allocation2]]
    %v418 = vstv %s417
    %v419 = vadd.f32 %v416, %v418
    %420 = vst [vmem:[%s9] sm:$0xff] %v419
    // Predicated region
    $region46: #{discriminator_forward.1} parent=1 // pred_check
      _
    $region47: #{discriminator_forward.1} parent=1 // pred_check_branch
      %422 = sbr.rel (0) target = $region49
    $region48: #{discriminator_forward.1} parent=1 // pred_region
      _
    $region49: #{discriminator_forward.1} parent=1 // pred_fallthru
      _
    // Predicated region
    $region50: #{discriminator_forward.1} parent=1 // pred_check
      _
    $region51: #{discriminator_forward.1} parent=1 // pred_check_branch
      %424 = sbr.rel (0) target = $region53
    $region52: #{discriminator_forward.1} parent=1 // pred_region
      _
    $region53: #{discriminator_forward.1} parent=1 // pred_fallthru
      _
    %425 = vsyncpa [#allocation4], 1
    %426 = vsyncpa [#allocation6], 1

</llo_original>
